<compile_context>
chip_gen: v7x
topology: tpu7x:2x2x1
jax: 0.10.0
libtpu: 0.0.40
codegen_flags: <defaults>
</compile_context>

<pallas_src>
import functools

import jax
import jax.numpy as jnp
from jax.experimental import pallas as pl
from jax.experimental.pallas import tpu as pltpu

_NEG_BIG = -1e30  # bias for padded output lanes -> softmax weight ~ 0


def _round_up(x, m):
    return ((x + m - 1) // m) * m


def _att_packed_kernel(xp_ref, wbd_ref, ones_ref, b_ref, o_ref, *, seg, mm_dtype):
    # xp_ref  : (tr, 128)   pack = 128 // seg logical rows per lane row
    # wbd_ref : (128, 128)  block-diagonal weight  kron(I_pack, W_pad^T)   (mm_dtype)
    # ones_ref: (128, 128)  kron(I_pack, ones(seg, seg))                   (f32)
    # b_ref   : (1, 128)    bias tiled `pack` times, padded lanes = -1e30  (f32)
    # o_ref   : (tr, 128)
    x = xp_ref[...]
    x_mm = x if x.dtype == mm_dtype else x.astype(mm_dtype)
    logits = jnp.dot(x_mm, wbd_ref[...], preferred_element_type=jnp.float32)
    logits = logits + b_ref[...]

    # Segmented (per logical row) max via XOR lane butterfly (XLU).
    lanes = logits.shape[-1]
    lane_idx = jax.lax.broadcasted_iota(jnp.int32, (1, lanes), 1)  # hoisted (1,128)
    m = logits
    s = 1
    while s < seg:
        up = pltpu.roll(m, lanes - s, axis=1)     # lane l <- lane (l + s)
        down = pltpu.roll(m, s, axis=1)           # lane l <- lane (l - s)
        m = jnp.maximum(m, jnp.where((lane_idx & s) == 0, up, down))
        s *= 2

    e = jnp.exp(logits - m)
    # Segmented sum on the MXU (keeps the vex/XLU slots for the max butterfly).
    denom = jnp.dot(e, ones_ref[...], preferred_element_type=jnp.float32)
    w = e * pl.reciprocal(denom, approx=True)

    o_ref[...] = (x.astype(jnp.float32) * w).astype(o_ref.dtype)


def _att_rowtile_kernel(x_ref, wt_ref, b_ref, o_ref, *, mm_dtype):
    # Fallback path (only used when net_num > 128): plain (tb, N) tiles.
    x = x_ref[...]
    x_mm = x if x.dtype == mm_dtype else x.astype(mm_dtype)
    logits = jnp.dot(x_mm, wt_ref[...], preferred_element_type=jnp.float32)
    logits = logits + b_ref[...]
    m = jnp.max(logits, axis=-1, keepdims=True)
    e = jnp.exp(logits - m)
    denom = jnp.sum(e, axis=-1, keepdims=True)
    w = e * pl.reciprocal(denom, approx=True)
    o_ref[...] = (x.astype(jnp.float32) * w).astype(o_ref.dtype)


def att_forward(data, weight, bias, *, block_rows=4096, matmul_dtype=None):
    """ATT forward. data: (B, N); weight: (N, N) as nn.Linear (out, in); bias: (N,).

    matmul_dtype: optional dtype for the logits matmul operands (e.g.
    jnp.bfloat16 on v5e); softmax math and the final data*w stay in f32.
    """
    B, N = data.shape
    assert weight.shape == (N, N) and bias.shape == (N,)
    mm_dtype = jnp.dtype(matmul_dtype) if matmul_dtype is not None else jnp.dtype(data.dtype)
    in_item = jnp.dtype(data.dtype).itemsize
    block_rows = max(8, min(8192, (int(block_rows) // 8) * 8))
    vmem_limit = 32 * 1024 * 1024  # raises v5e's 16MiB default; no-op on v6e/v7x
    bias_f32 = bias.astype(jnp.float32)

    if N <= 128:
        # ---------------- packed, lane-dense path -------------------------
        n_pad = max(1, pl.next_power_of_2(N))     # divides 128
        pack = 128 // n_pad
        lane = pack * n_pad                       # == 128
        b_pad_rows = _round_up(B, pack)

        if n_pad == N and b_pad_rows == B:
            data_p = data.reshape(B // pack, lane)            # layout-preserving
        else:
            # One pad pass (and one slice pass on the way out) when the batch
            # is ragged or net_num is not a power of two; still far cheaper
            # than the lane-sparse path for a bandwidth-bound op.
            data_p = jnp.zeros((b_pad_rows, n_pad), data.dtype).at[:B, :N].set(data)
            data_p = data_p.reshape(b_pad_rows // pack, lane)
        R = b_pad_rows // pack

        # Resident constants (constant index_map -> stay in VMEM across grid).
        wt_pad = jnp.zeros((n_pad, n_pad), jnp.float32).at[:N, :N].set(
            weight.astype(jnp.float32).T)
        wbd = jnp.kron(jnp.eye(pack, dtype=jnp.float32), wt_pad).astype(mm_dtype)
        ones_bd = jnp.kron(jnp.eye(pack, dtype=jnp.float32),
                           jnp.ones((n_pad, n_pad), jnp.float32))
        bias_lane = jnp.full((n_pad,), _NEG_BIG, jnp.float32).at[:N].set(bias_f32)
        bias_row = jnp.tile(bias_lane, pack).reshape(1, lane)

        # Tile height: as big as possible, but keep >=2 grid steps whenever
        # R > 8 so v7x's second TensorCore has work and pipelining overlaps.
        if R <= 8:
            tr = R
        else:
            tr = min(block_rows, _round_up(pl.cdiv(R, 2), 8), _round_up(R, 8))
        grid = (pl.cdiv(R, tr),)

        cost = pl.CostEstimate(
            flops=int(4 * R * lane * lane),
            transcendentals=int(R * lane),
            bytes_accessed=int(2 * R * lane * in_item + 2 * lane * lane * 4 + lane * 4),
        )

        out_p = pl.pallas_call(
            functools.partial(_att_packed_kernel, seg=n_pad, mm_dtype=mm_dtype),
            out_shape=jax.ShapeDtypeStruct((R, lane), data.dtype),
            grid=grid,
            in_specs=[
                pl.BlockSpec((tr, lane), lambda i: (i, 0)),
                pl.BlockSpec((lane, lane), lambda i: (0, 0)),
                pl.BlockSpec((lane, lane), lambda i: (0, 0)),
                pl.BlockSpec((1, lane), lambda i: (0, 0)),
            ],
            out_specs=pl.BlockSpec((tr, lane), lambda i: (i, 0)),
            compiler_params=pltpu.CompilerParams(
                dimension_semantics=("parallel",),
                vmem_limit_bytes=vmem_limit),
            cost_estimate=cost,
        )(data_p, wbd, ones_bd, bias_row)

        out = out_p.reshape(b_pad_rows, n_pad)
        if n_pad != N or b_pad_rows != B:
            out = out[:B, :N]
        return out

    # ---------------- fallback: net_num > 128 ------------------------------
    wt = weight.T.astype(mm_dtype)                 # (in, out) row-major matmul
    b_row = bias_f32.reshape(1, N)
    if B <= 8:
        tb = B
    else:
        cap = max(8, ((4 * 1024 * 1024) // max(1, N * in_item)) // 8 * 8)
        tb = max(8, min(block_rows, cap, _round_up(pl.cdiv(B, 2), 8), _round_up(B, 8)))
    grid = (pl.cdiv(B, tb),)
    cost = pl.CostEstimate(
        flops=int(2 * B * N * N),
        transcendentals=int(B * N),
        bytes_accessed=int(2 * B * N * in_item + (N * N + N) * 4),
    )
    return pl.pallas_call(
        functools.partial(_att_rowtile_kernel, mm_dtype=mm_dtype),
        out_shape=jax.ShapeDtypeStruct((B, N), data.dtype),
        grid=grid,
        in_specs=[
            pl.BlockSpec((tb, N), lambda i: (i, 0)),
            pl.BlockSpec((N, N), lambda i: (0, 0)),
            pl.BlockSpec((1, N), lambda i: (0, 0)),
        ],
        out_specs=pl.BlockSpec((tb, N), lambda i: (i, 0)),
        compiler_params=pltpu.CompilerParams(
            dimension_semantics=("parallel",),
            vmem_limit_bytes=vmem_limit),
        cost_estimate=cost,
    )(data, wt, b_row)


def _reference(d, w, b):
    logits = jnp.dot(d, w.T, precision=jax.lax.Precision.HIGHEST) + b
    return d * jax.nn.softmax(logits, axis=-1)


if __name__ == "__main__":
    key = jax.random.PRNGKey(0)
    ks = jax.random.split(key, 9)

    # Case 1: net_num = 8 (power of two, B % pack == 0) -> zero-copy packed
    # lane-dense kernel with a 2-step "parallel" grid.
    N1, B1 = 8, 1024
    bound1 = 1.0 / (N1 ** 0.5)
    w1 = jax.random.uniform(ks[0], (N1, N1), minval=-bound1, maxval=bound1, dtype=jnp.float32)
    b1 = jax.random.uniform(ks[1], (N1,), minval=-bound1, maxval=bound1, dtype=jnp.float32)
    d1 = jax.random.normal(ks[2], (B1, N1), dtype=jnp.float32)
    out1 = jax.block_until_ready(att_forward(d1, w1, b1))
    assert jnp.allclose(out1, _reference(d1, w1, b1), atol=2e-3, rtol=2e-3), "case1 mismatch"

    # Case 2: net_num = 6 (padded to 8), ragged batch -> still packed lane-dense.
    N2, B2 = 6, 100
    bound2 = 1.0 / (N2 ** 0.5)
    w2 = jax.random.uniform(ks[3], (N2, N2), minval=-bound2, maxval=bound2, dtype=jnp.float32)
    b2 = jax.random.uniform(ks[4], (N2,), minval=-bound2, maxval=bound2, dtype=jnp.float32)
    d2 = jax.random.normal(ks[5], (B2, N2), dtype=jnp.float32)
    out2 = jax.block_until_ready(att_forward(d2, w2, b2))
    assert jnp.allclose(out2, _reference(d2, w2, b2), atol=2e-3, rtol=2e-3), "case2 mismatch"

    # Case 3: net_num = 200 (> 128) -> row-tiled fallback kernel.
    N3, B3 = 200, 64
    bound3 = 1.0 / (N3 ** 0.5)
    w3 = jax.random.uniform(ks[6], (N3, N3), minval=-bound3, maxval=bound3, dtype=jnp.float32)
    b3 = jax.random.uniform(ks[7], (N3,), minval=-bound3, maxval=bound3, dtype=jnp.float32)
    d3 = jax.random.normal(ks[8], (B3, N3), dtype=jnp.float32)
    out3 = jax.block_until_ready(att_forward(d3, w3, b3))
    assert jnp.allclose(out3, _reference(d3, w3, b3), atol=2e-3, rtol=2e-3), "case3 mismatch"

    print("KERNEL_OK")
</pallas_src>

<mosaic_0001>
module attributes {stable_mosaic.version = 11 : i64} {
  func.func @_att_packed_kernel(%arg0: i32, %arg1: memref<32x128xf32, #tpu.memory_space<vmem>>, %arg2: memref<128x128xf32, #tpu.memory_space<vmem>>, %arg3: memref<128x128xf32, #tpu.memory_space<vmem>>, %arg4: memref<1x128xf32, #tpu.memory_space<vmem>>, %arg5: memref<32x128xf32, #tpu.memory_space<vmem>>) attributes {dimension_semantics = [#tpu.dimension_semantics<parallel>], iteration_bounds = array<i64: 2>, scalar_prefetch = 0 : i64, scratch_operands = 0 : i64, tpu.core_type = #tpu.core_type<tc>, window_params = [{transform_indices = @transform_0, window_bounds = array<i64: 32, 128>}, {pipeline_mode = #tpu.pipeline_mode<synchronous>, transform_indices = @transform_1, window_bounds = array<i64: 128, 128>}, {pipeline_mode = #tpu.pipeline_mode<synchronous>, transform_indices = @transform_2, window_bounds = array<i64: 128, 128>}, {pipeline_mode = #tpu.pipeline_mode<synchronous>, transform_indices = @transform_3, window_bounds = array<i64: 1, 128>}, {transform_indices = @transform_4, window_bounds = array<i64: 32, 128>}]} {
    %c0 = arith.constant 0 : index
    %c0_0 = arith.constant 0 : index
    %0 = vector.load %arg1[%c0, %c0_0] : memref<32x128xf32, #tpu.memory_space<vmem>>, vector<32x128xf32>
    %c0_1 = arith.constant 0 : index
    %c0_2 = arith.constant 0 : index
    %1 = vector.load %arg2[%c0_1, %c0_2] : memref<128x128xf32, #tpu.memory_space<vmem>>, vector<128x128xf32>
    %cst = arith.constant dense<0.000000e+00> : vector<32x128xf32>
    %2 = tpu.matmul %0, %1, %cst {dimension_numbers = #tpu.dot_dimension_numbers<[1], [0], [0], [1], [0, 0, 1, 1], [], []>} : vector<32x128xf32>, vector<128x128xf32>, vector<32x128xf32> -> vector<32x128xf32>
    %c0_3 = arith.constant 0 : index
    %c0_4 = arith.constant 0 : index
    %3 = vector.load %arg4[%c0_3, %c0_4] : memref<1x128xf32, #tpu.memory_space<vmem>>, vector<1x128xf32>
    %4 = vector.broadcast %3 : vector<1x128xf32> to vector<32x128xf32>
    %5 = arith.addf %2, %4 : vector<32x128xf32>
    %6 = tpu.iota {dimensions = array<i32: 1>} : vector<1x128xi32>
    %c127_i32 = arith.constant 127 : i32
    %7 = tpu.dynamic_rotate %5 by %c127_i32 dim 1 : vector<32x128xf32>, i32 -> vector<32x128xf32>
    %c1_i32 = arith.constant 1 : i32
    %8 = tpu.dynamic_rotate %5 by %c1_i32 dim 1 : vector<32x128xf32>, i32 -> vector<32x128xf32>
    %c1_i32_5 = arith.constant 1 : i32
    %9 = vector.broadcast %c1_i32_5 : i32 to vector<1x128xi32>
    %10 = arith.andi %6, %9 : vector<1x128xi32>
    %c0_i32 = arith.constant 0 : i32
    %11 = vector.broadcast %c0_i32 : i32 to vector<1x128xi32>
    %12 = arith.cmpi eq, %10, %11 : vector<1x128xi32>
    %13 = vector.shape_cast %12 : vector<1x128xi1> to vector<1x128xi1>
    %14 = vector.broadcast %13 : vector<1x128xi1> to vector<32x128xi1>
    %15 = arith.select %14, %7, %8 : vector<32x128xi1>, vector<32x128xf32>
    %16 = arith.maximumf %5, %15 : vector<32x128xf32>
    %c126_i32 = arith.constant 126 : i32
    %17 = tpu.dynamic_rotate %16 by %c126_i32 dim 1 : vector<32x128xf32>, i32 -> vector<32x128xf32>
    %c2_i32 = arith.constant 2 : i32
    %18 = tpu.dynamic_rotate %16 by %c2_i32 dim 1 : vector<32x128xf32>, i32 -> vector<32x128xf32>
    %c2_i32_6 = arith.constant 2 : i32
    %19 = vector.broadcast %c2_i32_6 : i32 to vector<1x128xi32>
    %20 = arith.andi %6, %19 : vector<1x128xi32>
    %c0_i32_7 = arith.constant 0 : i32
    %21 = vector.broadcast %c0_i32_7 : i32 to vector<1x128xi32>
    %22 = arith.cmpi eq, %20, %21 : vector<1x128xi32>
    %23 = vector.shape_cast %22 : vector<1x128xi1> to vector<1x128xi1>
    %24 = vector.broadcast %23 : vector<1x128xi1> to vector<32x128xi1>
    %25 = arith.select %24, %17, %18 : vector<32x128xi1>, vector<32x128xf32>
    %26 = arith.maximumf %16, %25 : vector<32x128xf32>
    %c124_i32 = arith.constant 124 : i32
    %27 = tpu.dynamic_rotate %26 by %c124_i32 dim 1 : vector<32x128xf32>, i32 -> vector<32x128xf32>
    %c4_i32 = arith.constant 4 : i32
    %28 = tpu.dynamic_rotate %26 by %c4_i32 dim 1 : vector<32x128xf32>, i32 -> vector<32x128xf32>
    %c4_i32_8 = arith.constant 4 : i32
    %29 = vector.broadcast %c4_i32_8 : i32 to vector<1x128xi32>
    %30 = arith.andi %6, %29 : vector<1x128xi32>
    %c0_i32_9 = arith.constant 0 : i32
    %31 = vector.broadcast %c0_i32_9 : i32 to vector<1x128xi32>
    %32 = arith.cmpi eq, %30, %31 : vector<1x128xi32>
    %33 = vector.shape_cast %32 : vector<1x128xi1> to vector<1x128xi1>
    %34 = vector.broadcast %33 : vector<1x128xi1> to vector<32x128xi1>
    %35 = arith.select %34, %27, %28 : vector<32x128xi1>, vector<32x128xf32>
    %36 = arith.maximumf %26, %35 : vector<32x128xf32>
    %37 = arith.subf %5, %36 : vector<32x128xf32>
    %38 = math.exp %37 : vector<32x128xf32>
    %c0_10 = arith.constant 0 : index
    %c0_11 = arith.constant 0 : index
    %39 = vector.load %arg3[%c0_10, %c0_11] : memref<128x128xf32, #tpu.memory_space<vmem>>, vector<128x128xf32>
    %cst_12 = arith.constant dense<0.000000e+00> : vector<32x128xf32>
    %40 = tpu.matmul %38, %39, %cst_12 {dimension_numbers = #tpu.dot_dimension_numbers<[1], [0], [0], [1], [0, 0, 1, 1], [], []>} : vector<32x128xf32>, vector<128x128xf32>, vector<32x128xf32> -> vector<32x128xf32>
    %41 = tpu.reciprocal %40 {approx = true} : vector<32x128xf32> -> vector<32x128xf32>
    %42 = arith.mulf %38, %41 : vector<32x128xf32>
    %43 = arith.mulf %0, %42 : vector<32x128xf32>
    %c0_13 = arith.constant 0 : index
    %c0_14 = arith.constant 0 : index
    %44 = vector.load %arg5[%c0_13, %c0_14] : memref<32x128xf32, #tpu.memory_space<vmem>>, vector<32x128xf32>
    tpu.vector_store %arg5[%c0_13, %c0_14], %43 {strides = array<i32>} : memref<32x128xf32, #tpu.memory_space<vmem>>, vector<32x128xf32>,
    return
  }
  func.func @transform_0(%arg0: i32) -> (i32, i32) {
    %c0_i32 = arith.constant 0 : i32
    %c0_i32_0 = arith.constant 0 : i32
    return %arg0, %c0_i32 : i32, i32
  }
  func.func @transform_1(%arg0: i32) -> (i32, i32) {
    %c0_i32 = arith.constant 0 : i32
    %c0_i32_0 = arith.constant 0 : i32
    %c0_i32_1 = arith.constant 0 : i32
    return %c0_i32, %c0_i32_0 : i32, i32
  }
  func.func @transform_2(%arg0: i32) -> (i32, i32) {
    %c0_i32 = arith.constant 0 : i32
    %c0_i32_0 = arith.constant 0 : i32
    %c0_i32_1 = arith.constant 0 : i32
    return %c0_i32, %c0_i32_0 : i32, i32
  }
  func.func @transform_3(%arg0: i32) -> (i32, i32) {
    %c0_i32 = arith.constant 0 : i32
    %c0_i32_0 = arith.constant 0 : i32
    %c0_i32_1 = arith.constant 0 : i32
    return %c0_i32, %c0_i32_0 : i32, i32
  }
  func.func @transform_4(%arg0: i32) -> (i32, i32) {
    %c0_i32 = arith.constant 0 : i32
    %c0_i32_0 = arith.constant 0 : i32
    return %arg0, %c0_i32 : i32, i32
  }
}

</mosaic_0001>

<llo_original>
// kernel: tpu_custom_call.1
$region0: #{tpu_custom_call.1}
  #allocation0 [shape = 'u32[]', space=smem, size = 0x4, offset = 0x4, fixed_abs, tag = 'smem constant byte address 0x4 - core index']
  #allocation1 [shape = 'u32[144,128]{1,0:T(1,128)}', space=vmem, size = 0x12000, scoped, tag = 'internal scratch']
  %s0 = inlined_call_operand.hbm [shape: f32[64,128], index: 0, kind: input, shape index: {}]
  %s1 = inlined_call_operand.hbm [shape: f32[128,128], index: 1, kind: input, shape index: {}]
  %s2 = inlined_call_operand.hbm [shape: f32[128,128], index: 2, kind: input, shape index: {}]
  %s3 = inlined_call_operand.vmem [shape: f32[1,128], index: 3, kind: input, shape index: {}]
  %s4 = inlined_call_operand.hbm [shape: f32[64,128], index: 4, kind: output, shape index: {}]
  %s5 = sld [smem:[#allocation0]]
  $region61: #{tpu_custom_call.1} parent=0
    _
  %s7 = ssub.s32 1, %s5
  %s8 = scalar_select 0, %s7, %s5
  $region1: #{tpu_custom_call.1} parent=0
    #allocation2 [shape = 'u8[32768]{0}', space=vmem, size = 0x8000, scoped, tag = 'input window, operand 0']
    #allocation3 [shape = 's32[2]{0}', space=sflag, size = 0x8, scoped, tag = 'scoped memory for tpu_custom_call.1']
    #allocation4 [shape = 's32[2]{0}', space=sflag, size = 0x8, scoped, tag = 'scoped memory for tpu_custom_call.1']
    #allocation5 [shape = 'u8[65536]{0}', space=vmem, size = 0x10000, scoped, tag = 'input window, operand 1, single buffered']
    #allocation6 [shape = 's32[1]{0}', space=sflag, size = 0x4, scoped, tag = 'scoped memory for tpu_custom_call.1']
    #allocation7 [shape = 'u8[65536]{0}', space=vmem, size = 0x10000, scoped, tag = 'input window, operand 2, single buffered']
    #allocation8 [shape = 'u8[32768]{0}', space=vmem, size = 0x8000, scoped, tag = 'output window, operand 0']
    %9 = vsyncpa [#allocation3], 0
    %s10 = scalar_lea.sflag [#allocation3], 1
    %11 = vsyncpa %s10, 0
    %12 = vsyncpa [#allocation6], 0
    %13 = vsyncpa [#allocation4], 0
    %s14 = scalar_lea.sflag [#allocation4], 1
    %15 = vsyncpa %s14, 0
    loop: start=0, step=1, limit=4
    $region2: #{tpu_custom_call.1} parent=1 // loop_pre_header
      _
    $region3: #{tpu_custom_call.1} parent=1 // loop_header
      %s17 = sphi 0, %s21
      %p18 = scmp.ge.s32.totalorder %s17, 4
      %s27 = sphi 0, %s29
      %s30 = sphi 0, %s27
      %s31 = sphi 0, %s30
      %s47 = sphi 0, %s31
      %s51 = sphi 0, %s51
      %s53 = sphi 0, %s51
      %s54 = sphi 0, %s53
      %s68 = sphi 0, %s54
      %s72 = sphi 0, %s72
      %s74 = sphi 0, %s72
      %s75 = sphi 0, %s74
      %s89 = sphi 0, %s75
      %s93 = sphi 0, %s93
      %s95 = sphi 0, %s93
      %s96 = sphi 0, %s95
      %s110 = sphi 0, %s96
      %s116 = sphi 0, %s118
      %s119 = sphi 0, %s116
      %s120 = sphi 0, %s119
      %s136 = sphi 0, %s120
    $region4: #{tpu_custom_call.1} parent=1 // loop_header_branch
      %20 = sbr.rel (%p18) target = $region8
    $region5: #{tpu_custom_call.1} parent=1 // loop_body
      %s22 = ssub.s32 %s17, 1
      %s23 = ssub.s32 %s17, 2
      %s24 = sadd.s32 %s17, 1
      %s25 = ssub.s32 %s17, %s24
      %p26 = scmp.eq.s32.totalorder %s25, 0
      %s28 = sadd.s32 %s27, 1
      %s29 = scalar_select %p26, %s27, %s28
      %p32 = pneg %p26
      %p33 = scmp.eq.s32.totalorder %s17, 1
      %p34 = por %p32, %p33
      %p35 = scmp.ne.s32.totalorder %s27, %s30
      %p36 = scmp.eq.s32.totalorder %s17, 0
      %p37 = por %p35, %p36
      %p38 = scmp.ne.s32.totalorder %s27, %s30
      %p39 = scmp.eq.s32.totalorder %s22, 1
      %p40 = por %p38, %p39
      %p41 = scmp.ne.s32.totalorder %s30, %s31
      %p42 = scmp.eq.s32.totalorder %s22, 0
      %p43 = por %p41, %p42
      %p44 = scmp.ne.s32.totalorder %s30, %s31
      %p45 = scmp.eq.s32.totalorder %s23, 1
      %p46 = por %p44, %p45
      %p48 = scmp.ne.s32.totalorder %s31, %s47
      %p49 = scmp.eq.s32.totalorder %s23, 0
      %p50 = por %p48, %p49
      %s52 = sadd.s32 %s51, 1
      %p55 = scmp.eq.s32.totalorder %s17, 1
      %p56 = scmp.ne.s32.totalorder %s51, %s53
      %p57 = scmp.eq.s32.totalorder %s17, 0
      %p58 = por %p56, %p57
      %p59 = scmp.ne.s32.totalorder %s51, %s53
      %p60 = scmp.eq.s32.totalorder %s22, 1
      %p61 = por %p59, %p60
      %p62 = scmp.ne.s32.totalorder %s53, %s54
      %p63 = scmp.eq.s32.totalorder %s22, 0
      %p64 = por %p62, %p63
      %p65 = scmp.ne.s32.totalorder %s53, %s54
      %p66 = scmp.eq.s32.totalorder %s23, 1
      %p67 = por %p65, %p66
      %p69 = scmp.ne.s32.totalorder %s54, %s68
      %p70 = scmp.eq.s32.totalorder %s23, 0
      %p71 = por %p69, %p70
      %s73 = sadd.s32 %s72, 1
      %p76 = scmp.eq.s32.totalorder %s17, 1
      %p77 = scmp.ne.s32.totalorder %s72, %s74
      %p78 = scmp.eq.s32.totalorder %s17, 0
      %p79 = por %p77, %p78
      %p80 = scmp.ne.s32.totalorder %s72, %s74
      %p81 = scmp.eq.s32.totalorder %s22, 1
      %p82 = por %p80, %p81
      %p83 = scmp.ne.s32.totalorder %s74, %s75
      %p84 = scmp.eq.s32.totalorder %s22, 0
      %p85 = por %p83, %p84
      %p86 = scmp.ne.s32.totalorder %s74, %s75
      %p87 = scmp.eq.s32.totalorder %s23, 1
      %p88 = por %p86, %p87
      %p90 = scmp.ne.s32.totalorder %s75, %s89
      %p91 = scmp.eq.s32.totalorder %s23, 0
      %p92 = por %p90, %p91
      %s94 = sadd.s32 %s93, 1
      %p97 = scmp.eq.s32.totalorder %s17, 1
      %p98 = scmp.ne.s32.totalorder %s93, %s95
      %p99 = scmp.eq.s32.totalorder %s17, 0
      %p100 = por %p98, %p99
      %p101 = scmp.ne.s32.totalorder %s93, %s95
      %p102 = scmp.eq.s32.totalorder %s22, 1
      %p103 = por %p101, %p102
      %p104 = scmp.ne.s32.totalorder %s95, %s96
      %p105 = scmp.eq.s32.totalorder %s22, 0
      %p106 = por %p104, %p105
      %p107 = scmp.ne.s32.totalorder %s95, %s96
      %p108 = scmp.eq.s32.totalorder %s23, 1
      %p109 = por %p107, %p108
      %p111 = scmp.ne.s32.totalorder %s96, %s110
      %p112 = scmp.eq.s32.totalorder %s23, 0
      %p113 = por %p111, %p112
      %s114 = ssub.s32 %s17, %s24
      %p115 = scmp.eq.s32.totalorder %s114, 0
      %s117 = sadd.s32 %s116, 1
      %s118 = scalar_select %p115, %s116, %s117
      %p121 = pneg %p115
      %p122 = scmp.eq.s32.totalorder %s17, 1
      %p123 = por %p121, %p122
      %p124 = scmp.ne.s32.totalorder %s116, %s119
      %p125 = scmp.eq.s32.totalorder %s17, 0
      %p126 = por %p124, %p125
      %p127 = scmp.ne.s32.totalorder %s116, %s119
      %p128 = scmp.eq.s32.totalorder %s22, 1
      %p129 = por %p127, %p128
      %p130 = scmp.ne.s32.totalorder %s119, %s120
      %p131 = scmp.eq.s32.totalorder %s22, 0
      %p132 = por %p130, %p131
      %p133 = scmp.ne.s32.totalorder %s119, %s120
      %p134 = scmp.eq.s32.totalorder %s23, 1
      %p135 = por %p133, %p134
      %p137 = scmp.ne.s32.totalorder %s120, %s136
      %p138 = scmp.eq.s32.totalorder %s23, 0
      %p139 = por %p137, %p138
      %p140 = scmp.le.s32.totalorder 1, %s17
      %p141 = scmp.lt.s32.totalorder %s17, 3
      %p142 = pnand %p140, %p141
      %p143 = pneg %p142
      // Predicated region
      $region9: #{tpu_custom_call.1} parent=5 // pred_check
        _
      $region10: #{tpu_custom_call.1} parent=5 // pred_check_branch
        %145 = sbr.rel (%p142) target = $region12
      $region11: #{tpu_custom_call.1} parent=5 // pred_region
        %s146 = ssub.s32 %s17, 1
        // Predicated region
        $region13: #{tpu_custom_call.1} parent=11 // pred_check
          %p147 = pneg %p64
        $region14: #{tpu_custom_call.1} parent=11 // pred_check_branch
          %149 = sbr.rel (%p147) target = $region16
        $region15: #{tpu_custom_call.1} parent=11 // pred_region
          %s151 = ssub.s32 2048, 2048
          %152 = vsyncadd [#allocation6], %s151
          %s153 = sshll.u32 [#allocation5], 4
          %s154 = int_to_ptr.vmem [resolvable:$true] %s153
          %159 = dma.hbm_to_vmem [thread:$0]  %s1, 2048, %s154, [#allocation6], 128, 128, 8
        $region16: #{tpu_custom_call.1} parent=11 // pred_fallthru
          _
        // Predicated region
        $region17: #{tpu_custom_call.1} parent=11 // pred_check
          %p160 = pneg %p85
        $region18: #{tpu_custom_call.1} parent=11 // pred_check_branch
          %162 = sbr.rel (%p160) target = $region20
        $region19: #{tpu_custom_call.1} parent=11 // pred_region
          %s164 = ssub.s32 2048, 2048
          %165 = vsyncadd [#allocation6], %s164
          %s166 = sshll.u32 [#allocation7], 4
          %s167 = int_to_ptr.vmem [resolvable:$true] %s166
          %172 = dma.hbm_to_vmem [thread:$0]  %s2, 2048, %s167, [#allocation6], 128, 128, 8
        $region20: #{tpu_custom_call.1} parent=11 // pred_fallthru
          _
        // Predicated region
        $region21: #{tpu_custom_call.1} parent=11 // pred_check
          %p173 = pneg %p106
        $region22: #{tpu_custom_call.1} parent=11 // pred_check_branch
          %175 = sbr.rel (%p173) target = $region24
        $region23: #{tpu_custom_call.1} parent=11 // pred_region
          _
        $region24: #{tpu_custom_call.1} parent=11 // pred_fallthru
          _
      $region12: #{tpu_custom_call.1} parent=5 // pred_fallthru
        _
      %p176 = scmp.lt.s32.totalorder %s17, 2
      // Predicated region
      $region25: #{tpu_custom_call.1} parent=5 // pred_check
        %p177 = pneg %p176
      $region26: #{tpu_custom_call.1} parent=5 // pred_check_branch
        %179 = sbr.rel (%p177) target = $region28
      $region27: #{tpu_custom_call.1} parent=5 // pred_region
        // Predicated region
        $region29: #{tpu_custom_call.1} parent=27 // pred_check
          %p180 = pneg %p37
        $region30: #{tpu_custom_call.1} parent=27 // pred_check_branch
          %182 = sbr.rel (%p180) target = $region32
        $region31: #{tpu_custom_call.1} parent=27 // pred_region
          %s183 = sand.u32 %s27, 1
          %s184 = scalar_lea.sflag [#allocation3], %s183
          %s185 = sand.u32 %s27, 1
          %s186 = smul.addr %s185, 32
          %s187 = scalar_lea.vmem [#allocation2], %s186
          %s188 = smul.u32 4, %s17
          %s190 = ssub.s32 512, 512
          %191 = vsyncadd %s184, %s190
          %s192 = smul.addr %s188, 128
          %s193 = scalar_lea.hbm %s0, %s192
          %s194 = sshll.u32 %s187, 4
          %s195 = int_to_ptr.vmem [resolvable:$true] %s194
          %200 = dma.hbm_to_vmem [thread:$0]  %s193, 512, %s195, %s184, 128, 128, 8
        $region32: #{tpu_custom_call.1} parent=27 // pred_fallthru
          _
      $region28: #{tpu_custom_call.1} parent=5 // pred_fallthru
        _
      %p201 = scmp.le.s32.totalorder 1, %s17
      %p202 = scmp.lt.s32.totalorder %s17, 3
      %p203 = pnand %p201, %p202
      %p204 = pneg %p203
      // Predicated region
      $region33: #{tpu_custom_call.1} parent=5 // pred_check
        _
      $region34: #{tpu_custom_call.1} parent=5 // pred_check_branch
        %206 = sbr.rel (%p203) target = $region36
      $region35: #{tpu_custom_call.1} parent=5 // pred_region
        %s207 = ssub.s32 %s17, 1
        %s208 = sand.u32 %s30, 1
        %s209 = scalar_lea.sflag [#allocation3], %s208
        %s210 = sand.u32 %s30, 1
        %s211 = smul.addr %s210, 32
        %s212 = scalar_lea.vmem [#allocation2], %s211
        // Predicated region
        $region37: #{tpu_custom_call.1} parent=35 // pred_check
          %p213 = pneg %p43
        $region38: #{tpu_custom_call.1} parent=35 // pred_check_branch
          %215 = sbr.rel (%p213) target = $region40
        $region39: #{tpu_custom_call.1} parent=35 // pred_region
          %216 = dma.done %s209, 512
        $region40: #{tpu_custom_call.1} parent=35 // pred_fallthru
          _
        // Predicated region
        $region41: #{tpu_custom_call.1} parent=35 // pred_check
          %p217 = pneg %p64
        $region42: #{tpu_custom_call.1} parent=35 // pred_check_branch
          %219 = sbr.rel (%p217) target = $region44
        $region43: #{tpu_custom_call.1} parent=35 // pred_region
          %220 = dma.done [#allocation6], 2048
        $region44: #{tpu_custom_call.1} parent=35 // pred_fallthru
          _
        // Predicated region
        $region45: #{tpu_custom_call.1} parent=35 // pred_check
          %p221 = pneg %p85
        $region46: #{tpu_custom_call.1} parent=35 // pred_check_branch
          %223 = sbr.rel (%p221) target = $region48
        $region47: #{tpu_custom_call.1} parent=35 // pred_region
          %224 = dma.done [#allocation6], 2048
        $region48: #{tpu_custom_call.1} parent=35 // pred_fallthru
          _
        %s225 = sand.u32 %s30, 1
        %s226 = scalar_lea.sflag [#allocation3], %s225
        %s227 = sand.u32 %s30, 1
        %s228 = smul.addr %s227, 32
        %s229 = scalar_lea.vmem [#allocation2], %s228
        %p230 = pneg %p43
        %p231 = pneg %p40
        %p232 = pneg %p64
        %p233 = pneg %p61
        %p234 = pneg %p85
        %p235 = pneg %p82
        %p236 = pneg %p106
        %p237 = pneg %p103
        %p238 = pneg %p132
        %p239 = pneg %p129
        %s240 = sand.u32 %s119, 1
        %s241 = scalar_lea.sflag [#allocation4], %s240
        %s242 = sand.u32 %s119, 1
        %s243 = smul.addr %s242, 32
        %s244 = scalar_lea.vmem [#allocation8], %s243
        %s245 = smul.u32 4, %s22
        %s246 = smul.u32 4, %s22
        %v247 = vld [vmem:[%s212] sm:$0xff]
        %v248 = vld [vmem:[%s212 + $0x8] sm:$0xff]
        %v249 = vld [vmem:[%s212 + $0x10] sm:$0xff]
        %v250 = vld [vmem:[%s212 + $0x18] sm:$0xff]
        %v251 = vld [vmem:[#allocation5] sm:$0xff]
        %v252 = vld [vmem:[#allocation5 + $0x8] sm:$0xff]
        %v253 = vld [vmem:[#allocation5 + $0x10] sm:$0xff]
        %v254 = vld [vmem:[#allocation5 + $0x18] sm:$0xff]
        %v255 = vld [vmem:[#allocation5 + $0x20] sm:$0xff]
        %v256 = vld [vmem:[#allocation5 + $0x28] sm:$0xff]
        %v257 = vld [vmem:[#allocation5 + $0x30] sm:$0xff]
        %v258 = vld [vmem:[#allocation5 + $0x38] sm:$0xff]
        %v259 = vld [vmem:[#allocation5 + $0x40] sm:$0xff]
        %v260 = vld [vmem:[#allocation5 + $0x48] sm:$0xff]
        %v261 = vld [vmem:[#allocation5 + $0x50] sm:$0xff]
        %v262 = vld [vmem:[#allocation5 + $0x58] sm:$0xff]
        %v263 = vld [vmem:[#allocation5 + $0x60] sm:$0xff]
        %v264 = vld [vmem:[#allocation5 + $0x68] sm:$0xff]
        %v265 = vld [vmem:[#allocation5 + $0x70] sm:$0xff]
        %v266 = vld [vmem:[#allocation5 + $0x78] sm:$0xff]
        %v267 = vld [vmem:[%s3] sm:$0x1]
        %v269 = vlaneseq
        %v270 = vshrl.u32 %v269, 7
        %v271 = vsub.s32 0, %v270
        %v272 = vrot.slane %v267, %v271
        %274 = vmatprep.subr.mxu0 0.0
        %275 = vmatpush1.msra.mxu0 %v251
        %276 = vmatprep.subr.mxu0 0.0
        %277 = vmatpush1.msra.mxu0 %v252
        %278 = vmatprep.subr.mxu0 0.0
        %279 = vmatpush1.msra.mxu0 %v253
        %280 = vmatprep.subr.mxu0 0.0
        %281 = vmatpush1.msra.mxu0 %v254
        %282 = vmatprep.subr.mxu0 0.0
        %283 = vmatpush1.msra.mxu0 %v255
        %284 = vmatprep.subr.mxu0 0.0
        %285 = vmatpush1.msra.mxu0 %v256
        %286 = vmatprep.subr.mxu0 0.0
        %287 = vmatpush1.msra.mxu0 %v257
        %288 = vmatprep.subr.mxu0 0.0
        %289 = vmatpush1.msra.mxu0 %v258
        %290 = vmatprep.subr.mxu0 0.0
        %291 = vmatpush1.msra.mxu0 %v259
        %292 = vmatprep.subr.mxu0 0.0
        %293 = vmatpush1.msra.mxu0 %v260
        %294 = vmatprep.subr.mxu0 0.0
        %295 = vmatpush1.msra.mxu0 %v261
        %296 = vmatprep.subr.mxu0 0.0
        %297 = vmatpush1.msra.mxu0 %v262
        %298 = vmatprep.subr.mxu0 0.0
        %299 = vmatpush1.msra.mxu0 %v263
        %300 = vmatprep.subr.mxu0 0.0
        %301 = vmatpush1.msra.mxu0 %v264
        %302 = vmatprep.subr.mxu0 0.0
        %303 = vmatpush1.msra.mxu0 %v265
        %304 = vmatprep.subr.mxu0 0.0
        %305 = vmatpush1.msra.mxu0 %v266
        %306 = vmatprep.subr.mxu0 0.0
        %307 = vmatpush1.msra.mxu0 0.0
        %308 = vmatprep.subr.mxu0 0.0
        %309 = vmatpush1.msra.mxu0 0.0
        %310 = vmatprep.subr.mxu0 0.0
        %311 = vmatpush1.msra.mxu0 0.0
        %312 = vmatprep.subr.mxu0 0.0
        %313 = vmatpush1.msra.mxu0 0.0
        %314 = vmatprep.subr.mxu0 0.0
        %315 = vmatpush1.msra.mxu0 0.0
        %316 = vmatprep.subr.mxu0 0.0
        %317 = vmatpush1.msra.mxu0 0.0
        %318 = vmatprep.subr.mxu0 0.0
        %319 = vmatpush1.msra.mxu0 0.0
        %320 = vmatprep.subr.mxu0 0.0
        %321 = vmatpush1.msra.mxu0 0.0
        %322 = vmatprep.subr.mxu0 0.0
        %323 = vmatpush1.msra.mxu0 0.0
        %324 = vmatprep.subr.mxu0 0.0
        %325 = vmatpush1.msra.mxu0 0.0
        %326 = vmatprep.subr.mxu0 0.0
        %327 = vmatpush1.msra.mxu0 0.0
        %328 = vmatprep.subr.mxu0 0.0
        %329 = vmatpush1.msra.mxu0 0.0
        %330 = vmatprep.subr.mxu0 0.0
        %331 = vmatpush1.msra.mxu0 0.0
        %332 = vmatprep.subr.mxu0 0.0
        %333 = vmatpush1.msra.mxu0 0.0
        %334 = vmatprep.subr.mxu0 0.0
        %335 = vmatpush1.msra.mxu0 0.0
        %336 = vmatprep.subr.mxu0 0.0
        %337 = vmatpush1.msra.mxu0 0.0
        %338 = vmatprep.mubr.f32.mxu0 0.0
        %339 = vmatmul.mubr.f32.gmra.mrb[0].mxu0 %v247
        %v340 = vpop.f32.mrb[0].mxu0
        %v341 = vadd.f32 %v272, %v340
        %v342 = vpop.f32.mrb[0].mxu0
        %343 = vmatprep.mubr.f32.mxu0 0.0
        %344 = vmatmul.mubr.f32.gmra.mrb[0].mxu0 %v248
        %v345 = vpop.f32.mrb[0].mxu0
        %v346 = vadd.f32 %v272, %v345
        %v347 = vpop.f32.mrb[0].mxu0
        %348 = vmatprep.mubr.f32.mxu0 0.0
        %349 = vmatmul.mubr.f32.gmra.mrb[0].mxu0 %v249
        %v350 = vpop.f32.mrb[0].mxu0
        %v351 = vadd.f32 %v272, %v350
        %v352 = vpop.f32.mrb[0].mxu0
        %353 = vmatprep.mubr.f32.mxu0 0.0
        %354 = vmatmul.mubr.f32.gmra.mrb[0].mxu0 %v250
        %v355 = vpop.f32.mrb[0].mxu0
        %v356 = vadd.f32 %v272, %v355
        %v357 = vpop.f32.mrb[0].mxu0
        %358 = vdwg.mxu0
        %v359 = vlaneseq
        %v360 = vand.u32 %v359, 127
        %361 = vrot.lane.b32.xlu0 %v341, 127
        %v362 = vpop.permute.xlu0 %361
        %363 = vrot.lane.b32.xlu0 %v346, 127
        %v364 = vpop.permute.xlu0 %363
        %365 = vrot.lane.b32.xlu0 %v351, 127
        %v366 = vpop.permute.xlu0 %365
        %367 = vrot.lane.b32.xlu0 %v356, 127
        %v368 = vpop.permute.xlu0 %367
        %369 = vrot.lane.b32.xlu0 %v341, 1
        %v370 = vpop.permute.xlu0 %369
        %371 = vrot.lane.b32.xlu0 %v346, 1
        %v372 = vpop.permute.xlu0 %371
        %373 = vrot.lane.b32.xlu0 %v351, 1
        %v374 = vpop.permute.xlu0 %373
        %375 = vrot.lane.b32.xlu0 %v356, 1
        %v376 = vpop.permute.xlu0 %375
        %v377 = vand.u32 %v360, 1
        %vm378 = vcmp.eq.s32.totalorder %v377, 0
        %v379 = vsel %vm378, 1, 0
        %vm380 = vcmp.eq.s32.totalorder %v379, 1
        %v381 = vsel %vm380, %v362, %v370
        %v382 = vsel %vm380, %v364, %v372
        %v383 = vsel %vm380, %v366, %v374
        %v384 = vsel %vm380, %v368, %v376
        %v385 = vmax.f32 %v341, %v381
        %v386 = vmax.f32 %v346, %v382
        %v387 = vmax.f32 %v351, %v383
        %v388 = vmax.f32 %v356, %v384
        %389 = vrot.lane.b32.xlu0 %v385, 126
        %v390 = vpop.permute.xlu0 %389
        %391 = vrot.lane.b32.xlu0 %v386, 126
        %v392 = vpop.permute.xlu0 %391
        %393 = vrot.lane.b32.xlu0 %v387, 126
        %v394 = vpop.permute.xlu0 %393
        %395 = vrot.lane.b32.xlu0 %v388, 126
        %v396 = vpop.permute.xlu0 %395
        %397 = vrot.lane.b32.xlu0 %v385, 2
        %v398 = vpop.permute.xlu0 %397
        %399 = vrot.lane.b32.xlu0 %v386, 2
        %v400 = vpop.permute.xlu0 %399
        %401 = vrot.lane.b32.xlu0 %v387, 2
        %v402 = vpop.permute.xlu0 %401
        %403 = vrot.lane.b32.xlu0 %v388, 2
        %v404 = vpop.permute.xlu0 %403
        %v405 = vand.u32 %v360, 2
        %vm406 = vcmp.eq.s32.totalorder %v405, 0
        %v407 = vsel %vm406, 1, 0
        %vm408 = vcmp.eq.s32.totalorder %v407, 1
        %v409 = vsel %vm408, %v390, %v398
        %v410 = vsel %vm408, %v392, %v400
        %v411 = vsel %vm408, %v394, %v402
        %v412 = vsel %vm408, %v396, %v404
        %v413 = vmax.f32 %v385, %v409
        %v414 = vmax.f32 %v386, %v410
        %v415 = vmax.f32 %v387, %v411
        %v416 = vmax.f32 %v388, %v412
        %417 = vrot.lane.b32.xlu0 %v413, 124
        %v418 = vpop.permute.xlu0 %417
        %419 = vrot.lane.b32.xlu0 %v414, 124
        %v420 = vpop.permute.xlu0 %419
        %421 = vrot.lane.b32.xlu0 %v415, 124
        %v422 = vpop.permute.xlu0 %421
        %423 = vrot.lane.b32.xlu0 %v416, 124
        %v424 = vpop.permute.xlu0 %423
        %425 = vrot.lane.b32.xlu0 %v413, 4
        %v426 = vpop.permute.xlu0 %425
        %427 = vrot.lane.b32.xlu0 %v414, 4
        %v428 = vpop.permute.xlu0 %427
        %429 = vrot.lane.b32.xlu0 %v415, 4
        %v430 = vpop.permute.xlu0 %429
        %431 = vrot.lane.b32.xlu0 %v416, 4
        %v432 = vpop.permute.xlu0 %431
        %v433 = vand.u32 %v360, 4
        %vm434 = vcmp.eq.s32.totalorder %v433, 0
        %v435 = vsel %vm434, 1, 0
        %vm436 = vcmp.eq.s32.totalorder %v435, 1
        %v437 = vsel %vm436, %v418, %v426
        %v438 = vsel %vm436, %v420, %v428
        %v439 = vsel %vm436, %v422, %v430
        %v440 = vsel %vm436, %v424, %v432
        %v441 = vmax.f32 %v413, %v437
        %v442 = vmax.f32 %v414, %v438
        %v443 = vmax.f32 %v415, %v439
        %v444 = vmax.f32 %v416, %v440
        %v445 = vsub.f32 %v341, %v441
        %v446 = vsub.f32 %v346, %v442
        %v447 = vsub.f32 %v351, %v443
        %v448 = vsub.f32 %v356, %v444
        %v449 = vmul.f32 %v445, 1.442695
        %v450 = vpow.pop %v449
        %v451 = vmul.f32 %v446, 1.442695
        %v452 = vpow.pop %v451
        %v453 = vmul.f32 %v447, 1.442695
        %v454 = vpow.pop %v453
        %v455 = vmul.f32 %v448, 1.442695
        %v456 = vpow.pop %v455
        %v457 = vld [vmem:[#allocation7] sm:$0xff]
        %v458 = vld [vmem:[#allocation7 + $0x8] sm:$0xff]
        %v459 = vld [vmem:[#allocation7 + $0x10] sm:$0xff]
        %v460 = vld [vmem:[#allocation7 + $0x18] sm:$0xff]
        %v461 = vld [vmem:[#allocation7 + $0x20] sm:$0xff]
        %v462 = vld [vmem:[#allocation7 + $0x28] sm:$0xff]
        %v463 = vld [vmem:[#allocation7 + $0x30] sm:$0xff]
        %v464 = vld [vmem:[#allocation7 + $0x38] sm:$0xff]
        %v465 = vld [vmem:[#allocation7 + $0x40] sm:$0xff]
        %v466 = vld [vmem:[#allocation7 + $0x48] sm:$0xff]
        %v467 = vld [vmem:[#allocation7 + $0x50] sm:$0xff]
        %v468 = vld [vmem:[#allocation7 + $0x58] sm:$0xff]
        %v469 = vld [vmem:[#allocation7 + $0x60] sm:$0xff]
        %v470 = vld [vmem:[#allocation7 + $0x68] sm:$0xff]
        %v471 = vld [vmem:[#allocation7 + $0x70] sm:$0xff]
        %v472 = vld [vmem:[#allocation7 + $0x78] sm:$0xff]
        %473 = vmatprep.subr.mxu0 0.0
        %474 = vmatpush1.msra.mxu0 %v457
        %475 = vmatprep.subr.mxu0 0.0
        %476 = vmatpush1.msra.mxu0 %v458
        %477 = vmatprep.subr.mxu0 0.0
        %478 = vmatpush1.msra.mxu0 %v459
        %479 = vmatprep.subr.mxu0 0.0
        %480 = vmatpush1.msra.mxu0 %v460
        %481 = vmatprep.subr.mxu0 0.0
        %482 = vmatpush1.msra.mxu0 %v461
        %483 = vmatprep.subr.mxu0 0.0
        %484 = vmatpush1.msra.mxu0 %v462
        %485 = vmatprep.subr.mxu0 0.0
        %486 = vmatpush1.msra.mxu0 %v463
        %487 = vmatprep.subr.mxu0 0.0
        %488 = vmatpush1.msra.mxu0 %v464
        %489 = vmatprep.subr.mxu0 0.0
        %490 = vmatpush1.msra.mxu0 %v465
        %491 = vmatprep.subr.mxu0 0.0
        %492 = vmatpush1.msra.mxu0 %v466
        %493 = vmatprep.subr.mxu0 0.0
        %494 = vmatpush1.msra.mxu0 %v467
        %495 = vmatprep.subr.mxu0 0.0
        %496 = vmatpush1.msra.mxu0 %v468
        %497 = vmatprep.subr.mxu0 0.0
        %498 = vmatpush1.msra.mxu0 %v469
        %499 = vmatprep.subr.mxu0 0.0
        %500 = vmatpush1.msra.mxu0 %v470
        %501 = vmatprep.subr.mxu0 0.0
        %502 = vmatpush1.msra.mxu0 %v471
        %503 = vmatprep.subr.mxu0 0.0
        %504 = vmatpush1.msra.mxu0 %v472
        %505 = vmatprep.subr.mxu0 0.0
        %506 = vmatpush1.msra.mxu0 0.0
        %507 = vmatprep.subr.mxu0 0.0
        %508 = vmatpush1.msra.mxu0 0.0
        %509 = vmatprep.subr.mxu0 0.0
        %510 = vmatpush1.msra.mxu0 0.0
        %511 = vmatprep.subr.mxu0 0.0
        %512 = vmatpush1.msra.mxu0 0.0
        %513 = vmatprep.subr.mxu0 0.0
        %514 = vmatpush1.msra.mxu0 0.0
        %515 = vmatprep.subr.mxu0 0.0
        %516 = vmatpush1.msra.mxu0 0.0
        %517 = vmatprep.subr.mxu0 0.0
        %518 = vmatpush1.msra.mxu0 0.0
        %519 = vmatprep.subr.mxu0 0.0
        %520 = vmatpush1.msra.mxu0 0.0
        %521 = vmatprep.subr.mxu0 0.0
        %522 = vmatpush1.msra.mxu0 0.0
        %523 = vmatprep.subr.mxu0 0.0
        %524 = vmatpush1.msra.mxu0 0.0
        %525 = vmatprep.subr.mxu0 0.0
        %526 = vmatpush1.msra.mxu0 0.0
        %527 = vmatprep.subr.mxu0 0.0
        %528 = vmatpush1.msra.mxu0 0.0
        %529 = vmatprep.subr.mxu0 0.0
        %530 = vmatpush1.msra.mxu0 0.0
        %531 = vmatprep.subr.mxu0 0.0
        %532 = vmatpush1.msra.mxu0 0.0
        %533 = vmatprep.subr.mxu0 0.0
        %534 = vmatpush1.msra.mxu0 0.0
        %535 = vmatprep.subr.mxu0 0.0
        %536 = vmatpush1.msra.mxu0 0.0
        %537 = vmatprep.mubr.f32.mxu0 0.0
        %538 = vmatmul.mubr.f32.gmra.mrb[0].mxu0 %v450
        %v539 = vpop.f32.mrb[0].mxu0
        %v540 = vadd.f32 0.0, %v539
        %v541 = vpop.f32.mrb[0].mxu0
        %542 = vmatprep.mubr.f32.mxu0 0.0
        %543 = vmatmul.mubr.f32.gmra.mrb[0].mxu0 %v452
        %v544 = vpop.f32.mrb[0].mxu0
        %v545 = vadd.f32 0.0, %v544
        %v546 = vpop.f32.mrb[0].mxu0
        %547 = vmatprep.mubr.f32.mxu0 0.0
        %548 = vmatmul.mubr.f32.gmra.mrb[0].mxu0 %v454
        %v549 = vpop.f32.mrb[0].mxu0
        %v550 = vadd.f32 0.0, %v549
        %v551 = vpop.f32.mrb[0].mxu0
        %552 = vmatprep.mubr.f32.mxu0 0.0
        %553 = vmatmul.mubr.f32.gmra.mrb[0].mxu0 %v456
        %v554 = vpop.f32.mrb[0].mxu0
        %v555 = vadd.f32 0.0, %v554
        %v556 = vpop.f32.mrb[0].mxu0
        %557 = vdwg.mxu0
        %v558 = vrcp.pop %v540
        %v559 = vrcp.pop %v545
        %v560 = vrcp.pop %v550
        %v561 = vrcp.pop %v555
        %v562 = vmul.f32 %v450, %v558
        %v563 = vmul.f32 %v452, %v559
        %v564 = vmul.f32 %v454, %v560
        %v565 = vmul.f32 %v456, %v561
        %v566 = vmul.f32 %v247, %v562
        %v567 = vmul.f32 %v248, %v563
        %v568 = vmul.f32 %v249, %v564
        %v569 = vmul.f32 %v250, %v565
        %570 = vst [vmem:[%s244] sm:$0xff] %v566
        %571 = vst [vmem:[%s244 + $0x8] sm:$0xff] %v567
        %572 = vst [vmem:[%s244 + $0x10] sm:$0xff] %v568
        %573 = vst [vmem:[%s244 + $0x18] sm:$0xff] %v569
        %s574 = sand.u32 %s119, 1
        %s575 = scalar_lea.sflag [#allocation4], %s574
        %s576 = sand.u32 %s119, 1
        %s577 = smul.addr %s576, 32
        %s578 = scalar_lea.vmem [#allocation8], %s577
        // Predicated region
        $region49: #{tpu_custom_call.1} parent=35 // pred_check
          %p579 = pneg %p129
        $region50: #{tpu_custom_call.1} parent=35 // pred_check_branch
          %581 = sbr.rel (%p579) target = $region52
        $region51: #{tpu_custom_call.1} parent=35 // pred_region
          %s582 = smul.u32 4, %s22
          %s584 = ssub.s32 512, 512
          %585 = vsyncadd %s575, %s584
          %s586 = smul.addr %s582, 128
          %s587 = scalar_lea.hbm %s4, %s586
          %s588 = sshll.u32 %s578, 4
          %s589 = int_to_ptr.vmem [resolvable:$true] %s588
          %594 = dma.vmem_to_hbm [thread:$0]  %s589, 512, %s587, %s575, 128, 128, 8
        $region52: #{tpu_custom_call.1} parent=35 // pred_fallthru
          _
      $region36: #{tpu_custom_call.1} parent=5 // pred_fallthru
        _
      %p595 = scmp.le.s32.totalorder 2, %s17
      // Predicated region
      $region53: #{tpu_custom_call.1} parent=5 // pred_check
        %p596 = pneg %p595
      $region54: #{tpu_custom_call.1} parent=5 // pred_check_branch
        %598 = sbr.rel (%p596) target = $region56
      $region55: #{tpu_custom_call.1} parent=5 // pred_region
        %s599 = ssub.s32 %s17, 2
        // Predicated region
        $region57: #{tpu_custom_call.1} parent=55 // pred_check
          %p600 = pneg %p135
        $region58: #{tpu_custom_call.1} parent=55 // pred_check_branch
          %602 = sbr.rel (%p600) target = $region60
        $region59: #{tpu_custom_call.1} parent=55 // pred_region
          %s603 = sand.u32 %s120, 1
          %s604 = scalar_lea.sflag [#allocation4], %s603
          %s605 = sand.u32 %s120, 1
          %s606 = smul.addr %s605, 32
          %s607 = scalar_lea.vmem [#allocation8], %s606
          %608 = dma.done %s604, 512
        $region60: #{tpu_custom_call.1} parent=55 // pred_fallthru
          _
      $region56: #{tpu_custom_call.1} parent=5 // pred_fallthru
        _
    $region6: #{tpu_custom_call.1} parent=1 // loop_footer
      %s21 = sadd.s32 1, %s17
    $region7: #{tpu_custom_call.1} parent=1 // loop_footer_branch
      %16 = sbr.rel target = $region3
    $region8: #{tpu_custom_call.1} parent=1 // loop_exit
      _
    %609 = vsyncpa [#allocation3], 1
    %s610 = scalar_lea.sflag [#allocation3], 1
    %611 = vsyncpa %s610, 1
    %612 = vsyncpa [#allocation6], 1
    %613 = vsyncpa [#allocation4], 1
    %s614 = scalar_lea.sflag [#allocation4], 1
    %615 = vsyncpa %s614, 1

</llo_original>
